<compile_context>
chip_gen: v6e
topology: v6e:2x2x1
jax: 0.10.0
libtpu: 0.0.40
codegen_flags: <defaults>
</compile_context>

<pallas_src>
import numpy as np
import jax
import jax.numpy as jnp
from jax.experimental import pallas as pl
from jax.experimental.pallas import tpu as pltpu


def init_mlp_params(num_layers, input_dim, output_dim, hidden_dim, skip_in,
                    geometric_init, key):
    """Replicates _MLP.__init__ parameter shapes + init, deterministically."""
    hidden_sizes = [input_dim] + [hidden_dim] * (num_layers - 1) + [output_dim]
    n_sizes = len(hidden_sizes)          # == self.num_layers in the torch module
    skip_conn = set(skip_in)
    params = []
    for layer in range(1, n_sizes):
        in_size = hidden_sizes[layer - 1]
        out_size = hidden_sizes[layer]
        if layer + 1 in skip_conn:
            out_size -= input_dim
        key, kw, kb = jax.random.split(key, 3)
        if geometric_init:
            if layer == n_sizes - 1:
                w = (np.sqrt(np.pi) / np.sqrt(out_size)
                     + 1e-5 * jax.random.normal(kw, (out_size, in_size)))
                b = -jnp.ones((out_size,), jnp.float32)
            else:
                w = (np.sqrt(2.0) / np.sqrt(out_size)
                     * jax.random.normal(kw, (out_size, in_size)))
                b = jnp.zeros((out_size,), jnp.float32)
        else:
            bound = 1.0 / np.sqrt(in_size)
            w = jax.random.uniform(kw, (out_size, in_size), minval=-bound, maxval=bound)
            b = jax.random.uniform(kb, (out_size,), minval=-bound, maxval=bound)
        params.append((jnp.asarray(w, jnp.float32), jnp.asarray(b, jnp.float32)))
    return params, skip_conn


def mlp_ref(params, skip_conn, x):
    """Pure-JAX reference: mirrors _MLP.forward exactly (activation = ReLU)."""
    h = x
    for idx, (w, b) in enumerate(params[:-1]):
        if idx + 1 in skip_conn:
            h = jnp.concatenate([h, x], axis=-1)
        h = jnp.maximum(h @ w.T + b, 0.0)
    w, b = params[-1]
    return h @ w.T + b


def make_kernel(layer_specs):
    """layer_specs: list of (has_skip: bool, has_activation: bool) per linear.

    Kernel is feature-major:
      x_ref:   (input_dim, tile_b)
      weights: (out, in) as PyTorch stores them, biases: (out, 1) f32
      out_ref: (output_dim, tile_b)
    """
    def kernel(*refs):
        x_ref = refs[0]
        out_ref = refs[-1]
        prefs = refs[1:-1]
        x = x_ref[...]                               # (input_dim, tile_b) f32
        h = x
        i = 0
        for skip, act in layer_specs:
            if skip:
                # W @ cat([h, x]) split into two MXU matmuls (no sublane concat).
                w_h = prefs[i][...]                  # (out, h_dim)
                w_x = prefs[i + 1][...]              # (out, input_dim)
                b = prefs[i + 2][...]                # (out, 1) f32
                i += 3
                z = (jnp.dot(w_h, h.astype(w_h.dtype),
                             preferred_element_type=jnp.float32)
                     + jnp.dot(w_x, x.astype(w_x.dtype),
                               preferred_element_type=jnp.float32)
                     + b)
            else:
                w = prefs[i][...]                    # (out, in)
                b = prefs[i + 1][...]                # (out, 1) f32
                i += 2
                z = jnp.dot(w, h.astype(w.dtype),
                            preferred_element_type=jnp.float32) + b
            h = jnp.maximum(z, 0.0) if act else z    # lane-dense VPU ReLU
        out_ref[...] = h.astype(out_ref.dtype)       # lane-dense, unmasked store
    return kernel


def mlp_pallas(params, skip_conn, x, *, tile_b=256, weights_dtype=jnp.float32):
    """Feature-major Pallas forward.

    x: (B, input_dim) f32, returns (B, output_dim) f32.
    tile_b must be a multiple of 128 (lane width); 256-512 amortizes the
    per-grid-step overhead.  weights_dtype=jnp.bfloat16 halves weight bytes /
    doubles MXU rate on v6e/v7x (keep f32 on v5e and for strict precision).
    """
    B, input_dim = x.shape
    num_lin = len(params)
    assert tile_b % 128 == 0, "tile_b must be a multiple of the 128-lane width"

    # Pad batch so every block is (feat, tile_b) with tile_b % 128 == 0.
    n_steps = pl.cdiv(B, tile_b)
    B_pad = n_steps * tile_b
    xt = x.T                                          # (input_dim, B): lanes = batch
    if B_pad != B:
        xt = jnp.pad(xt, ((0, 0), (0, B_pad - B)))

    flat_args = []
    layer_specs = []
    h_dim = input_dim
    for idx, (w, b) in enumerate(params):
        act = idx < num_lin - 1                       # last linear: no activation
        skip = (idx + 1 in skip_conn) and act         # forward only skips in linears[:-1]
        wd = w.astype(weights_dtype)                  # (out, in), PyTorch layout
        if skip:
            # Column split implements the concat: cat([h, x]) with h first.
            flat_args += [wd[:, :h_dim], wd[:, h_dim:], b[:, None].astype(jnp.float32)]
        else:
            flat_args += [wd, b[:, None].astype(jnp.float32)]
        layer_specs.append((skip, act))
        h_dim = w.shape[0]
    output_dim = params[-1][0].shape[0]

    grid = (n_steps,)
    # Activation tile: (input_dim, tile_b), streamed/double-buffered per step.
    in_specs = [pl.BlockSpec((input_dim, tile_b), lambda i: (0, i))]
    # Parameters: tiny + grid-invariant -> whole-array resident in VMEM.
    for _ in flat_args:
        in_specs.append(pl.BlockSpec(memory_space=pltpu.MemorySpace.VMEM))
    out_specs = pl.BlockSpec((output_dim, tile_b), lambda i: (0, i))

    kernel = make_kernel(layer_specs)
    out_t = pl.pallas_call(
        kernel,
        out_shape=jax.ShapeDtypeStruct((output_dim, B_pad), x.dtype),
        grid=grid,
        in_specs=in_specs,
        out_specs=out_specs,
        compiler_params=pltpu.CompilerParams(
            dimension_semantics=("parallel",)),      # megacore sharding on v7x
    )(xt, *flat_args)
    return out_t[:, :B].T                             # back to (B, output_dim)


if __name__ == "__main__":
    # Config consistent with DeepSDF usage of _MLP (activation = nn.ReLU()).
    num_layers = 4
    input_dim = 3
    output_dim = 1
    hidden_dim = 32
    skip_in = [2]               # x is concatenated back in before linear idx 1
    geometric_init = True

    key = jax.random.PRNGKey(0)
    key, kp, kx = jax.random.split(key, 3)
    params, skip_conn = init_mlp_params(num_layers, input_dim, output_dim,
                                        hidden_dim, skip_in, geometric_init, kp)

    # Main check: B chosen so the grid has >= 2 parallel steps (v7x megacore).
    B = 512
    x = jax.random.normal(kx, (B, input_dim), dtype=jnp.float32)

    out = mlp_pallas(params, skip_conn, x, tile_b=256)
    out = jax.block_until_ready(out)

    ref = mlp_ref(params, skip_conn, x)
    np.testing.assert_allclose(np.asarray(out), np.asarray(ref),
                               rtol=1e-5, atol=1e-5)
    assert out.shape == (B, output_dim)

    # Ragged-batch check: exercises the zero-pad + slice path.
    key, kx2 = jax.random.split(key)
    B2 = 200
    x2 = jax.random.normal(kx2, (B2, input_dim), dtype=jnp.float32)
    out2 = jax.block_until_ready(mlp_pallas(params, skip_conn, x2, tile_b=256))
    ref2 = mlp_ref(params, skip_conn, x2)
    np.testing.assert_allclose(np.asarray(out2), np.asarray(ref2),
                               rtol=1e-5, atol=1e-5)
    assert out2.shape == (B2, output_dim)

    print("KERNEL_OK")
</pallas_src>

<mosaic_0001>
module attributes {stable_mosaic.version = 11 : i64} {
  func.func @kernel(%arg0: i32, %arg1: memref<3x256xf32, #tpu.memory_space<vmem>>, %arg2: memref<29x3xf32, #tpu.memory_space<vmem>>, %arg3: memref<29x1xf32, #tpu.memory_space<vmem>>, %arg4: memref<32x29xf32, #tpu.memory_space<vmem>>, %arg5: memref<32x3xf32, #tpu.memory_space<vmem>>, %arg6: memref<32x1xf32, #tpu.memory_space<vmem>>, %arg7: memref<32x32xf32, #tpu.memory_space<vmem>>, %arg8: memref<32x1xf32, #tpu.memory_space<vmem>>, %arg9: memref<1x32xf32, #tpu.memory_space<vmem>>, %arg10: memref<1x1xf32, #tpu.memory_space<vmem>>, %arg11: memref<1x256xf32, #tpu.memory_space<vmem>>) attributes {dimension_semantics = [#tpu.dimension_semantics<parallel>], iteration_bounds = array<i64: 2>, scalar_prefetch = 0 : i64, scratch_operands = 0 : i64, tpu.core_type = #tpu.core_type<tc>, window_params = [{transform_indices = @transform_0, window_bounds = array<i64: 3, 256>}, {pipeline_mode = #tpu.pipeline_mode<synchronous>, transform_indices = @transform_1, window_bounds = array<i64: 29, 3>}, {pipeline_mode = #tpu.pipeline_mode<synchronous>, transform_indices = @transform_2, window_bounds = array<i64: 29, 1>}, {pipeline_mode = #tpu.pipeline_mode<synchronous>, transform_indices = @transform_3, window_bounds = array<i64: 32, 29>}, {pipeline_mode = #tpu.pipeline_mode<synchronous>, transform_indices = @transform_4, window_bounds = array<i64: 32, 3>}, {pipeline_mode = #tpu.pipeline_mode<synchronous>, transform_indices = @transform_5, window_bounds = array<i64: 32, 1>}, {pipeline_mode = #tpu.pipeline_mode<synchronous>, transform_indices = @transform_6, window_bounds = array<i64: 32, 32>}, {pipeline_mode = #tpu.pipeline_mode<synchronous>, transform_indices = @transform_7, window_bounds = array<i64: 32, 1>}, {pipeline_mode = #tpu.pipeline_mode<synchronous>, transform_indices = @transform_8, window_bounds = array<i64: 1, 32>}, {pipeline_mode = #tpu.pipeline_mode<synchronous>, transform_indices = @transform_9, window_bounds = array<i64: 1, 1>}, {transform_indices = @transform_10, window_bounds = array<i64: 1, 256>}]} {
    %c0 = arith.constant 0 : index
    %c0_0 = arith.constant 0 : index
    %0 = vector.load %arg1[%c0, %c0_0] : memref<3x256xf32, #tpu.memory_space<vmem>>, vector<3x256xf32>
    %c0_1 = arith.constant 0 : index
    %c0_2 = arith.constant 0 : index
    %1 = vector.load %arg2[%c0_1, %c0_2] : memref<29x3xf32, #tpu.memory_space<vmem>>, vector<29x3xf32>
    %c0_3 = arith.constant 0 : index
    %c0_4 = arith.constant 0 : index
    %2 = vector.load %arg3[%c0_3, %c0_4] : memref<29x1xf32, #tpu.memory_space<vmem>>, vector<29x1xf32>
    %cst = arith.constant dense<0.000000e+00> : vector<29x256xf32>
    %3 = tpu.matmul %1, %0, %cst {dimension_numbers = #tpu.dot_dimension_numbers<[1], [0], [0], [1], [0, 0, 1, 1], [], []>} : vector<29x3xf32>, vector<3x256xf32>, vector<29x256xf32> -> vector<29x256xf32>
    %4 = vector.broadcast %2 : vector<29x1xf32> to vector<29x256xf32>
    %5 = arith.addf %3, %4 : vector<29x256xf32>
    %cst_5 = arith.constant 0.000000e+00 : f32
    %6 = vector.broadcast %cst_5 : f32 to vector<29x256xf32>
    %7 = arith.maximumf %5, %6 : vector<29x256xf32>
    %c0_6 = arith.constant 0 : index
    %c0_7 = arith.constant 0 : index
    %8 = vector.load %arg4[%c0_6, %c0_7] : memref<32x29xf32, #tpu.memory_space<vmem>>, vector<32x29xf32>
    %c0_8 = arith.constant 0 : index
    %c0_9 = arith.constant 0 : index
    %9 = vector.load %arg5[%c0_8, %c0_9] : memref<32x3xf32, #tpu.memory_space<vmem>>, vector<32x3xf32>
    %c0_10 = arith.constant 0 : index
    %c0_11 = arith.constant 0 : index
    %10 = vector.load %arg6[%c0_10, %c0_11] : memref<32x1xf32, #tpu.memory_space<vmem>>, vector<32x1xf32>
    %cst_12 = arith.constant dense<0.000000e+00> : vector<32x256xf32>
    %11 = tpu.matmul %8, %7, %cst_12 {dimension_numbers = #tpu.dot_dimension_numbers<[1], [0], [0], [1], [0, 0, 1, 1], [], []>} : vector<32x29xf32>, vector<29x256xf32>, vector<32x256xf32> -> vector<32x256xf32>
    %cst_13 = arith.constant dense<0.000000e+00> : vector<32x256xf32>
    %12 = tpu.matmul %9, %0, %cst_13 {dimension_numbers = #tpu.dot_dimension_numbers<[1], [0], [0], [1], [0, 0, 1, 1], [], []>} : vector<32x3xf32>, vector<3x256xf32>, vector<32x256xf32> -> vector<32x256xf32>
    %13 = arith.addf %11, %12 : vector<32x256xf32>
    %14 = vector.broadcast %10 : vector<32x1xf32> to vector<32x256xf32>
    %15 = arith.addf %13, %14 : vector<32x256xf32>
    %cst_14 = arith.constant 0.000000e+00 : f32
    %16 = vector.broadcast %cst_14 : f32 to vector<32x256xf32>
    %17 = arith.maximumf %15, %16 : vector<32x256xf32>
    %c0_15 = arith.constant 0 : index
    %c0_16 = arith.constant 0 : index
    %18 = vector.load %arg7[%c0_15, %c0_16] : memref<32x32xf32, #tpu.memory_space<vmem>>, vector<32x32xf32>
    %c0_17 = arith.constant 0 : index
    %c0_18 = arith.constant 0 : index
    %19 = vector.load %arg8[%c0_17, %c0_18] : memref<32x1xf32, #tpu.memory_space<vmem>>, vector<32x1xf32>
    %cst_19 = arith.constant dense<0.000000e+00> : vector<32x256xf32>
    %20 = tpu.matmul %18, %17, %cst_19 {dimension_numbers = #tpu.dot_dimension_numbers<[1], [0], [0], [1], [0, 0, 1, 1], [], []>} : vector<32x32xf32>, vector<32x256xf32>, vector<32x256xf32> -> vector<32x256xf32>
    %21 = vector.broadcast %19 : vector<32x1xf32> to vector<32x256xf32>
    %22 = arith.addf %20, %21 : vector<32x256xf32>
    %cst_20 = arith.constant 0.000000e+00 : f32
    %23 = vector.broadcast %cst_20 : f32 to vector<32x256xf32>
    %24 = arith.maximumf %22, %23 : vector<32x256xf32>
    %c0_21 = arith.constant 0 : index
    %c0_22 = arith.constant 0 : index
    %25 = vector.load %arg9[%c0_21, %c0_22] : memref<1x32xf32, #tpu.memory_space<vmem>>, vector<1x32xf32>
    %c0_23 = arith.constant 0 : index
    %c0_24 = arith.constant 0 : index
    %26 = vector.load %arg10[%c0_23, %c0_24] : memref<1x1xf32, #tpu.memory_space<vmem>>, vector<1x1xf32>
    %cst_25 = arith.constant dense<0.000000e+00> : vector<1x256xf32>
    %27 = tpu.matmul %25, %24, %cst_25 {dimension_numbers = #tpu.dot_dimension_numbers<[1], [0], [0], [1], [0, 0, 1, 1], [], []>} : vector<1x32xf32>, vector<32x256xf32>, vector<1x256xf32> -> vector<1x256xf32>
    %28 = vector.broadcast %26 : vector<1x1xf32> to vector<1x256xf32>
    %29 = arith.addf %27, %28 : vector<1x256xf32>
    %c0_26 = arith.constant 0 : index
    %c0_27 = arith.constant 0 : index
    %30 = vector.load %arg11[%c0_26, %c0_27] : memref<1x256xf32, #tpu.memory_space<vmem>>, vector<1x256xf32>
    tpu.vector_store %arg11[%c0_26, %c0_27], %29 {strides = array<i32>} : memref<1x256xf32, #tpu.memory_space<vmem>>, vector<1x256xf32>,
    return
  }
  func.func @transform_0(%arg0: i32) -> (i32, i32) {
    %c0_i32 = arith.constant 0 : i32
    %c0_i32_0 = arith.constant 0 : i32
    return %c0_i32, %arg0 : i32, i32
  }
  func.func @transform_1(%arg0: i32) -> (i32, i32) {
    %c0_i32 = arith.constant 0 : i32
    %c0_i32_0 = arith.constant 0 : i32
    %c0_i32_1 = arith.constant 0 : i32
    return %c0_i32, %c0_i32_0 : i32, i32
  }
  func.func @transform_2(%arg0: i32) -> (i32, i32) {
    %c0_i32 = arith.constant 0 : i32
    %c0_i32_0 = arith.constant 0 : i32
    %c0_i32_1 = arith.constant 0 : i32
    return %c0_i32, %c0_i32_0 : i32, i32
  }
  func.func @transform_3(%arg0: i32) -> (i32, i32) {
    %c0_i32 = arith.constant 0 : i32
    %c0_i32_0 = arith.constant 0 : i32
    %c0_i32_1 = arith.constant 0 : i32
    return %c0_i32, %c0_i32_0 : i32, i32
  }
  func.func @transform_4(%arg0: i32) -> (i32, i32) {
    %c0_i32 = arith.constant 0 : i32
    %c0_i32_0 = arith.constant 0 : i32
    %c0_i32_1 = arith.constant 0 : i32
    return %c0_i32, %c0_i32_0 : i32, i32
  }
  func.func @transform_5(%arg0: i32) -> (i32, i32) {
    %c0_i32 = arith.constant 0 : i32
    %c0_i32_0 = arith.constant 0 : i32
    %c0_i32_1 = arith.constant 0 : i32
    return %c0_i32, %c0_i32_0 : i32, i32
  }
  func.func @transform_6(%arg0: i32) -> (i32, i32) {
    %c0_i32 = arith.constant 0 : i32
    %c0_i32_0 = arith.constant 0 : i32
    %c0_i32_1 = arith.constant 0 : i32
    return %c0_i32, %c0_i32_0 : i32, i32
  }
  func.func @transform_7(%arg0: i32) -> (i32, i32) {
    %c0_i32 = arith.constant 0 : i32
    %c0_i32_0 = arith.constant 0 : i32
    %c0_i32_1 = arith.constant 0 : i32
    return %c0_i32, %c0_i32_0 : i32, i32
  }
  func.func @transform_8(%arg0: i32) -> (i32, i32) {
    %c0_i32 = arith.constant 0 : i32
    %c0_i32_0 = arith.constant 0 : i32
    %c0_i32_1 = arith.constant 0 : i32
    return %c0_i32, %c0_i32_0 : i32, i32
  }
  func.func @transform_9(%arg0: i32) -> (i32, i32) {
    %c0_i32 = arith.constant 0 : i32
    %c0_i32_0 = arith.constant 0 : i32
    %c0_i32_1 = arith.constant 0 : i32
    return %c0_i32, %c0_i32_0 : i32, i32
  }
  func.func @transform_10(%arg0: i32) -> (i32, i32) {
    %c0_i32 = arith.constant 0 : i32
    %c0_i32_0 = arith.constant 0 : i32
    return %c0_i32, %arg0 : i32, i32
  }
}

</mosaic_0001>

<llo_original>
// kernel: tpu_custom_call.1
$region0: #{tpu_custom_call.1}
  #allocation0 [shape = 'u32[]', space=smem, size = 0x4, offset = 0x4, fixed_abs, tag = 'smem constant byte address 0x4 - core index']
  #allocation1 [shape = 'u32[144,128]{1,0:T(1,128)}', space=vmem, size = 0x12000, scoped, tag = 'internal scratch']
  #allocation2 [shape = 'f32[1,1]{1,0:T(1,128)S(1)}', space=vmem, size = 0x200, scoped, tag = 'scoped memory for tpu_custom_call.1']
  %s0 = inlined_call_operand.vmem [shape: f32[3,512], index: 0, kind: input, shape index: {}]
  %s1 = inlined_call_operand.vmem [shape: f32[29,3], index: 1, kind: input, shape index: {}]
  %s2 = inlined_call_operand.vmem [shape: f32[29,1], index: 2, kind: input, shape index: {}]
  %s3 = inlined_call_operand.vmem [shape: f32[32,29], index: 3, kind: input, shape index: {}]
  %s4 = inlined_call_operand.vmem [shape: f32[32,3], index: 4, kind: input, shape index: {}]
  %s5 = inlined_call_operand.vmem [shape: f32[32,1], index: 5, kind: input, shape index: {}]
  %s6 = inlined_call_operand.vmem [shape: f32[32,32], index: 6, kind: input, shape index: {}]
  %s7 = inlined_call_operand.vmem [shape: f32[32,1], index: 7, kind: input, shape index: {}]
  %s8 = inlined_call_operand.vmem [shape: f32[1,32], index: 8, kind: input, shape index: {}]
  %s9 = inlined_call_operand.<no memory space> [shape: f32[1,1], index: 9, kind: input, shape index: {}]
  %s10 = inlined_call_operand.hbm [shape: f32[1,512], index: 10, kind: output, shape index: {}]
  %s11 = sld [smem:[#allocation0]]
  $region73: #{tpu_custom_call.1} parent=0
    _
  %s13 = ssub.s32 1, %s11
  %s14 = scalar_select 0, %s13, %s11
  %v15 = vstv %s9
  %16 = vst [vmem:[#allocation2] sm:$0x1] %v15
  $region1: #{tpu_custom_call.1} parent=0
    #allocation3 [shape = 'u8[2048]{0}', space=vmem, size = 0x800, scoped, tag = 'output window, operand 0']
    #allocation4 [shape = 's32[2]{0}', space=sflag, size = 0x8, scoped, tag = 'scoped memory for tpu_custom_call.1']
    %17 = vsyncpa [#allocation4], 0
    %s18 = scalar_lea.sflag [#allocation4], 1
    %19 = vsyncpa %s18, 0
    loop: start=0, step=1, limit=4
    $region2: #{tpu_custom_call.1} parent=1 // loop_pre_header
      _
    $region3: #{tpu_custom_call.1} parent=1 // loop_header
      %s21 = sphi 0, %s25
      %p22 = scmp.ge.s32.totalorder %s21, 4
      %s31 = sphi 0, %s33
      %s34 = sphi 0, %s31
      %s35 = sphi 0, %s34
      %s51 = sphi 0, %s35
      %s55 = sphi 0, %s55
      %s57 = sphi 0, %s55
      %s58 = sphi 0, %s57
      %s72 = sphi 0, %s58
      %s76 = sphi 0, %s76
      %s78 = sphi 0, %s76
      %s79 = sphi 0, %s78
      %s93 = sphi 0, %s79
      %s97 = sphi 0, %s97
      %s99 = sphi 0, %s97
      %s100 = sphi 0, %s99
      %s114 = sphi 0, %s100
      %s118 = sphi 0, %s118
      %s120 = sphi 0, %s118
      %s121 = sphi 0, %s120
      %s135 = sphi 0, %s121
      %s139 = sphi 0, %s139
      %s141 = sphi 0, %s139
      %s142 = sphi 0, %s141
      %s156 = sphi 0, %s142
      %s160 = sphi 0, %s160
      %s162 = sphi 0, %s160
      %s163 = sphi 0, %s162
      %s177 = sphi 0, %s163
      %s181 = sphi 0, %s181
      %s183 = sphi 0, %s181
      %s184 = sphi 0, %s183
      %s198 = sphi 0, %s184
      %s202 = sphi 0, %s202
      %s204 = sphi 0, %s202
      %s205 = sphi 0, %s204
      %s219 = sphi 0, %s205
      %s223 = sphi 0, %s223
      %s225 = sphi 0, %s223
      %s226 = sphi 0, %s225
      %s240 = sphi 0, %s226
      %s246 = sphi 0, %s248
      %s249 = sphi 0, %s246
      %s250 = sphi 0, %s249
      %s266 = sphi 0, %s250
    $region4: #{tpu_custom_call.1} parent=1 // loop_header_branch
      %24 = sbr.rel (%p22) target = $region8
    $region5: #{tpu_custom_call.1} parent=1 // loop_body
      %s26 = ssub.s32 %s21, 1
      %s27 = ssub.s32 %s21, 2
      %s28 = sadd.s32 %s21, 1
      %s29 = ssub.s32 %s21, %s28
      %p30 = scmp.eq.s32.totalorder %s29, 0
      %s32 = sadd.s32 %s31, 1
      %s33 = scalar_select %p30, %s31, %s32
      %p36 = pneg %p30
      %p37 = scmp.eq.s32.totalorder %s21, 1
      %p38 = por %p36, %p37
      %p39 = scmp.ne.s32.totalorder %s31, %s34
      %p40 = scmp.eq.s32.totalorder %s21, 0
      %p41 = por %p39, %p40
      %p42 = scmp.ne.s32.totalorder %s31, %s34
      %p43 = scmp.eq.s32.totalorder %s26, 1
      %p44 = por %p42, %p43
      %p45 = scmp.ne.s32.totalorder %s34, %s35
      %p46 = scmp.eq.s32.totalorder %s26, 0
      %p47 = por %p45, %p46
      %p48 = scmp.ne.s32.totalorder %s34, %s35
      %p49 = scmp.eq.s32.totalorder %s27, 1
      %p50 = por %p48, %p49
      %p52 = scmp.ne.s32.totalorder %s35, %s51
      %p53 = scmp.eq.s32.totalorder %s27, 0
      %p54 = por %p52, %p53
      %s56 = sadd.s32 %s55, 1
      %p59 = scmp.eq.s32.totalorder %s21, 1
      %p60 = scmp.ne.s32.totalorder %s55, %s57
      %p61 = scmp.eq.s32.totalorder %s21, 0
      %p62 = por %p60, %p61
      %p63 = scmp.ne.s32.totalorder %s55, %s57
      %p64 = scmp.eq.s32.totalorder %s26, 1
      %p65 = por %p63, %p64
      %p66 = scmp.ne.s32.totalorder %s57, %s58
      %p67 = scmp.eq.s32.totalorder %s26, 0
      %p68 = por %p66, %p67
      %p69 = scmp.ne.s32.totalorder %s57, %s58
      %p70 = scmp.eq.s32.totalorder %s27, 1
      %p71 = por %p69, %p70
      %p73 = scmp.ne.s32.totalorder %s58, %s72
      %p74 = scmp.eq.s32.totalorder %s27, 0
      %p75 = por %p73, %p74
      %s77 = sadd.s32 %s76, 1
      %p80 = scmp.eq.s32.totalorder %s21, 1
      %p81 = scmp.ne.s32.totalorder %s76, %s78
      %p82 = scmp.eq.s32.totalorder %s21, 0
      %p83 = por %p81, %p82
      %p84 = scmp.ne.s32.totalorder %s76, %s78
      %p85 = scmp.eq.s32.totalorder %s26, 1
      %p86 = por %p84, %p85
      %p87 = scmp.ne.s32.totalorder %s78, %s79
      %p88 = scmp.eq.s32.totalorder %s26, 0
      %p89 = por %p87, %p88
      %p90 = scmp.ne.s32.totalorder %s78, %s79
      %p91 = scmp.eq.s32.totalorder %s27, 1
      %p92 = por %p90, %p91
      %p94 = scmp.ne.s32.totalorder %s79, %s93
      %p95 = scmp.eq.s32.totalorder %s27, 0
      %p96 = por %p94, %p95
      %s98 = sadd.s32 %s97, 1
      %p101 = scmp.eq.s32.totalorder %s21, 1
      %p102 = scmp.ne.s32.totalorder %s97, %s99
      %p103 = scmp.eq.s32.totalorder %s21, 0
      %p104 = por %p102, %p103
      %p105 = scmp.ne.s32.totalorder %s97, %s99
      %p106 = scmp.eq.s32.totalorder %s26, 1
      %p107 = por %p105, %p106
      %p108 = scmp.ne.s32.totalorder %s99, %s100
      %p109 = scmp.eq.s32.totalorder %s26, 0
      %p110 = por %p108, %p109
      %p111 = scmp.ne.s32.totalorder %s99, %s100
      %p112 = scmp.eq.s32.totalorder %s27, 1
      %p113 = por %p111, %p112
      %p115 = scmp.ne.s32.totalorder %s100, %s114
      %p116 = scmp.eq.s32.totalorder %s27, 0
      %p117 = por %p115, %p116
      %s119 = sadd.s32 %s118, 1
      %p122 = scmp.eq.s32.totalorder %s21, 1
      %p123 = scmp.ne.s32.totalorder %s118, %s120
      %p124 = scmp.eq.s32.totalorder %s21, 0
      %p125 = por %p123, %p124
      %p126 = scmp.ne.s32.totalorder %s118, %s120
      %p127 = scmp.eq.s32.totalorder %s26, 1
      %p128 = por %p126, %p127
      %p129 = scmp.ne.s32.totalorder %s120, %s121
      %p130 = scmp.eq.s32.totalorder %s26, 0
      %p131 = por %p129, %p130
      %p132 = scmp.ne.s32.totalorder %s120, %s121
      %p133 = scmp.eq.s32.totalorder %s27, 1
      %p134 = por %p132, %p133
      %p136 = scmp.ne.s32.totalorder %s121, %s135
      %p137 = scmp.eq.s32.totalorder %s27, 0
      %p138 = por %p136, %p137
      %s140 = sadd.s32 %s139, 1
      %p143 = scmp.eq.s32.totalorder %s21, 1
      %p144 = scmp.ne.s32.totalorder %s139, %s141
      %p145 = scmp.eq.s32.totalorder %s21, 0
      %p146 = por %p144, %p145
      %p147 = scmp.ne.s32.totalorder %s139, %s141
      %p148 = scmp.eq.s32.totalorder %s26, 1
      %p149 = por %p147, %p148
      %p150 = scmp.ne.s32.totalorder %s141, %s142
      %p151 = scmp.eq.s32.totalorder %s26, 0
      %p152 = por %p150, %p151
      %p153 = scmp.ne.s32.totalorder %s141, %s142
      %p154 = scmp.eq.s32.totalorder %s27, 1
      %p155 = por %p153, %p154
      %p157 = scmp.ne.s32.totalorder %s142, %s156
      %p158 = scmp.eq.s32.totalorder %s27, 0
      %p159 = por %p157, %p158
      %s161 = sadd.s32 %s160, 1
      %p164 = scmp.eq.s32.totalorder %s21, 1
      %p165 = scmp.ne.s32.totalorder %s160, %s162
      %p166 = scmp.eq.s32.totalorder %s21, 0
      %p167 = por %p165, %p166
      %p168 = scmp.ne.s32.totalorder %s160, %s162
      %p169 = scmp.eq.s32.totalorder %s26, 1
      %p170 = por %p168, %p169
      %p171 = scmp.ne.s32.totalorder %s162, %s163
      %p172 = scmp.eq.s32.totalorder %s26, 0
      %p173 = por %p171, %p172
      %p174 = scmp.ne.s32.totalorder %s162, %s163
      %p175 = scmp.eq.s32.totalorder %s27, 1
      %p176 = por %p174, %p175
      %p178 = scmp.ne.s32.totalorder %s163, %s177
      %p179 = scmp.eq.s32.totalorder %s27, 0
      %p180 = por %p178, %p179
      %s182 = sadd.s32 %s181, 1
      %p185 = scmp.eq.s32.totalorder %s21, 1
      %p186 = scmp.ne.s32.totalorder %s181, %s183
      %p187 = scmp.eq.s32.totalorder %s21, 0
      %p188 = por %p186, %p187
      %p189 = scmp.ne.s32.totalorder %s181, %s183
      %p190 = scmp.eq.s32.totalorder %s26, 1
      %p191 = por %p189, %p190
      %p192 = scmp.ne.s32.totalorder %s183, %s184
      %p193 = scmp.eq.s32.totalorder %s26, 0
      %p194 = por %p192, %p193
      %p195 = scmp.ne.s32.totalorder %s183, %s184
      %p196 = scmp.eq.s32.totalorder %s27, 1
      %p197 = por %p195, %p196
      %p199 = scmp.ne.s32.totalorder %s184, %s198
      %p200 = scmp.eq.s32.totalorder %s27, 0
      %p201 = por %p199, %p200
      %s203 = sadd.s32 %s202, 1
      %p206 = scmp.eq.s32.totalorder %s21, 1
      %p207 = scmp.ne.s32.totalorder %s202, %s204
      %p208 = scmp.eq.s32.totalorder %s21, 0
      %p209 = por %p207, %p208
      %p210 = scmp.ne.s32.totalorder %s202, %s204
      %p211 = scmp.eq.s32.totalorder %s26, 1
      %p212 = por %p210, %p211
      %p213 = scmp.ne.s32.totalorder %s204, %s205
      %p214 = scmp.eq.s32.totalorder %s26, 0
      %p215 = por %p213, %p214
      %p216 = scmp.ne.s32.totalorder %s204, %s205
      %p217 = scmp.eq.s32.totalorder %s27, 1
      %p218 = por %p216, %p217
      %p220 = scmp.ne.s32.totalorder %s205, %s219
      %p221 = scmp.eq.s32.totalorder %s27, 0
      %p222 = por %p220, %p221
      %s224 = sadd.s32 %s223, 1
      %p227 = scmp.eq.s32.totalorder %s21, 1
      %p228 = scmp.ne.s32.totalorder %s223, %s225
      %p229 = scmp.eq.s32.totalorder %s21, 0
      %p230 = por %p228, %p229
      %p231 = scmp.ne.s32.totalorder %s223, %s225
      %p232 = scmp.eq.s32.totalorder %s26, 1
      %p233 = por %p231, %p232
      %p234 = scmp.ne.s32.totalorder %s225, %s226
      %p235 = scmp.eq.s32.totalorder %s26, 0
      %p236 = por %p234, %p235
      %p237 = scmp.ne.s32.totalorder %s225, %s226
      %p238 = scmp.eq.s32.totalorder %s27, 1
      %p239 = por %p237, %p238
      %p241 = scmp.ne.s32.totalorder %s226, %s240
      %p242 = scmp.eq.s32.totalorder %s27, 0
      %p243 = por %p241, %p242
      %s244 = ssub.s32 %s21, %s28
      %p245 = scmp.eq.s32.totalorder %s244, 0
      %s247 = sadd.s32 %s246, 1
      %s248 = scalar_select %p245, %s246, %s247
      %p251 = pneg %p245
      %p252 = scmp.eq.s32.totalorder %s21, 1
      %p253 = por %p251, %p252
      %p254 = scmp.ne.s32.totalorder %s246, %s249
      %p255 = scmp.eq.s32.totalorder %s21, 0
      %p256 = por %p254, %p255
      %p257 = scmp.ne.s32.totalorder %s246, %s249
      %p258 = scmp.eq.s32.totalorder %s26, 1
      %p259 = por %p257, %p258
      %p260 = scmp.ne.s32.totalorder %s249, %s250
      %p261 = scmp.eq.s32.totalorder %s26, 0
      %p262 = por %p260, %p261
      %p263 = scmp.ne.s32.totalorder %s249, %s250
      %p264 = scmp.eq.s32.totalorder %s27, 1
      %p265 = por %p263, %p264
      %p267 = scmp.ne.s32.totalorder %s250, %s266
      %p268 = scmp.eq.s32.totalorder %s27, 0
      %p269 = por %p267, %p268
      %p270 = scmp.le.s32.totalorder 1, %s21
      %p271 = scmp.lt.s32.totalorder %s21, 3
      %p272 = pnand %p270, %p271
      %p273 = pneg %p272
      // Predicated region
      $region9: #{tpu_custom_call.1} parent=5 // pred_check
        _
      $region10: #{tpu_custom_call.1} parent=5 // pred_check_branch
        %275 = sbr.rel (%p272) target = $region12
      $region11: #{tpu_custom_call.1} parent=5 // pred_region
        %s276 = ssub.s32 %s21, 1
        // Predicated region
        $region13: #{tpu_custom_call.1} parent=11 // pred_check
          %p277 = pneg %p68
        $region14: #{tpu_custom_call.1} parent=11 // pred_check_branch
          %279 = sbr.rel (%p277) target = $region16
        $region15: #{tpu_custom_call.1} parent=11 // pred_region
          _
        $region16: #{tpu_custom_call.1} parent=11 // pred_fallthru
          _
        // Predicated region
        $region17: #{tpu_custom_call.1} parent=11 // pred_check
          %p280 = pneg %p89
        $region18: #{tpu_custom_call.1} parent=11 // pred_check_branch
          %282 = sbr.rel (%p280) target = $region20
        $region19: #{tpu_custom_call.1} parent=11 // pred_region
          _
        $region20: #{tpu_custom_call.1} parent=11 // pred_fallthru
          _
        // Predicated region
        $region21: #{tpu_custom_call.1} parent=11 // pred_check
          %p283 = pneg %p110
        $region22: #{tpu_custom_call.1} parent=11 // pred_check_branch
          %285 = sbr.rel (%p283) target = $region24
        $region23: #{tpu_custom_call.1} parent=11 // pred_region
          _
        $region24: #{tpu_custom_call.1} parent=11 // pred_fallthru
          _
        // Predicated region
        $region25: #{tpu_custom_call.1} parent=11 // pred_check
          %p286 = pneg %p131
        $region26: #{tpu_custom_call.1} parent=11 // pred_check_branch
          %288 = sbr.rel (%p286) target = $region28
        $region27: #{tpu_custom_call.1} parent=11 // pred_region
          _
        $region28: #{tpu_custom_call.1} parent=11 // pred_fallthru
          _
        // Predicated region
        $region29: #{tpu_custom_call.1} parent=11 // pred_check
          %p289 = pneg %p152
        $region30: #{tpu_custom_call.1} parent=11 // pred_check_branch
          %291 = sbr.rel (%p289) target = $region32
        $region31: #{tpu_custom_call.1} parent=11 // pred_region
          _
        $region32: #{tpu_custom_call.1} parent=11 // pred_fallthru
          _
        // Predicated region
        $region33: #{tpu_custom_call.1} parent=11 // pred_check
          %p292 = pneg %p173
        $region34: #{tpu_custom_call.1} parent=11 // pred_check_branch
          %294 = sbr.rel (%p292) target = $region36
        $region35: #{tpu_custom_call.1} parent=11 // pred_region
          _
        $region36: #{tpu_custom_call.1} parent=11 // pred_fallthru
          _
        // Predicated region
        $region37: #{tpu_custom_call.1} parent=11 // pred_check
          %p295 = pneg %p194
        $region38: #{tpu_custom_call.1} parent=11 // pred_check_branch
          %297 = sbr.rel (%p295) target = $region40
        $region39: #{tpu_custom_call.1} parent=11 // pred_region
          _
        $region40: #{tpu_custom_call.1} parent=11 // pred_fallthru
          _
        // Predicated region
        $region41: #{tpu_custom_call.1} parent=11 // pred_check
          %p298 = pneg %p215
        $region42: #{tpu_custom_call.1} parent=11 // pred_check_branch
          %300 = sbr.rel (%p298) target = $region44
        $region43: #{tpu_custom_call.1} parent=11 // pred_region
          _
        $region44: #{tpu_custom_call.1} parent=11 // pred_fallthru
          _
        // Predicated region
        $region45: #{tpu_custom_call.1} parent=11 // pred_check
          %p301 = pneg %p236
        $region46: #{tpu_custom_call.1} parent=11 // pred_check_branch
          %303 = sbr.rel (%p301) target = $region48
        $region47: #{tpu_custom_call.1} parent=11 // pred_region
          _
        $region48: #{tpu_custom_call.1} parent=11 // pred_fallthru
          _
      $region12: #{tpu_custom_call.1} parent=5 // pred_fallthru
        _
      %p304 = scmp.lt.s32.totalorder %s21, 2
      // Predicated region
      $region49: #{tpu_custom_call.1} parent=5 // pred_check
        %p305 = pneg %p304
      $region50: #{tpu_custom_call.1} parent=5 // pred_check_branch
        %307 = sbr.rel (%p305) target = $region52
      $region51: #{tpu_custom_call.1} parent=5 // pred_region
        // Predicated region
        $region53: #{tpu_custom_call.1} parent=51 // pred_check
          %p308 = pneg %p41
        $region54: #{tpu_custom_call.1} parent=51 // pred_check_branch
          %310 = sbr.rel (%p308) target = $region56
        $region55: #{tpu_custom_call.1} parent=51 // pred_region
          %s311 = smul.u32 2, %s21
          %p312 = scmp.lt.s32.totalorder %s311, 3
          %s313 = scalar_select %p312, %s311, 3
          %s314 = smul.addr %s313, 4
          %s315 = scalar_lea.vmem %s0, %s314
          %s316 = smul.u32 2, %s21
        $region56: #{tpu_custom_call.1} parent=51 // pred_fallthru
          _
      $region52: #{tpu_custom_call.1} parent=5 // pred_fallthru
        _
      %p317 = scmp.le.s32.totalorder 1, %s21
      %p318 = scmp.lt.s32.totalorder %s21, 3
      %p319 = pnand %p317, %p318
      %p320 = pneg %p319
      // Predicated region
      $region57: #{tpu_custom_call.1} parent=5 // pred_check
        _
      $region58: #{tpu_custom_call.1} parent=5 // pred_check_branch
        %322 = sbr.rel (%p319) target = $region60
      $region59: #{tpu_custom_call.1} parent=5 // pred_region
        %s323 = ssub.s32 %s21, 1
        %s324 = smul.u32 2, %s26
        %p325 = scmp.lt.s32.totalorder %s324, 3
        %s326 = scalar_select %p325, %s324, 3
        %s327 = smul.addr %s326, 4
        %s328 = scalar_lea.vmem %s0, %s327
        %p329 = pneg %p47
        %p330 = pneg %p44
        %p331 = pneg %p68
        %p332 = pneg %p65
        %p333 = pneg %p89
        %p334 = pneg %p86
        %p335 = pneg %p110
        %p336 = pneg %p107
        %p337 = pneg %p131
        %p338 = pneg %p128
        %p339 = pneg %p152
        %p340 = pneg %p149
        %p341 = pneg %p173
        %p342 = pneg %p170
        %p343 = pneg %p194
        %p344 = pneg %p191
        %p345 = pneg %p215
        %p346 = pneg %p212
        %p347 = pneg %p236
        %p348 = pneg %p233
        %p349 = pneg %p262
        %p350 = pneg %p259
        %s351 = sand.u32 %s249, 1
        %s352 = scalar_lea.sflag [#allocation4], %s351
        %s353 = sand.u32 %s249, 1
        %s354 = smul.addr %s353, 2
        %s355 = scalar_lea.vmem [#allocation3], %s354
        %s356 = smul.u32 2, %s26
        %p357 = scmp.lt.s32.totalorder %s356, 3
        %s358 = scalar_select %p357, %s356, 3
        %s359 = smul.addr %s358, 4
        %s360 = scalar_lea.vmem %s0, %s359
        %s361 = smul.u32 2, %s26
        %s362 = smul.u32 2, %s26
        %v363 = vld [vmem:[%s360] sm:$0x77]
        %v364 = vld [vmem:[%s1] sm:$0xff]
        %v365 = vld [vmem:[%s1 + $0x8] sm:$0xff]
        %v366 = vld [vmem:[%s1 + $0x10] sm:$0xff]
        %v367 = vld [vmem:[%s1 + $0x18] sm:$0x1f]
        %v368 = vld [vmem:[%s2] sm:$0xff]
        %v369 = vld [vmem:[%s2 + $0x8] sm:$0xff]
        %v370 = vld [vmem:[%s2 + $0x10] sm:$0xff]
        %v371 = vld [vmem:[%s2 + $0x18] sm:$0x1f]
        %373 = vset.pattern.permute.xlu0 0
        %374 = vperm.xlu0 %373, %v368
        %v375 = vpop.permute.xlu0 %374
        %378 = vset.pattern.permute.xlu0 0
        %379 = vperm.xlu0 %378, %v369
        %v380 = vpop.permute.xlu0 %379
        %383 = vset.pattern.permute.xlu0 0
        %384 = vperm.xlu0 %383, %v370
        %v385 = vpop.permute.xlu0 %384
        %388 = vset.pattern.permute.xlu0 0
        %389 = vperm.xlu0 %388, %v371
        %v390 = vpop.permute.xlu0 %389
        %v393 = vcombine.high %v363, %v363
        %vm394 = vcmask 23552
        %v396 = vsel %vm394, %v364, 0
        %v399 = vsel %vm394, %v365, 0
        %v402 = vsel %vm394, %v366, 0
        %v405 = vsel %vm394, %v367, 0
        %vm407 = vcmask 1042432
        %v408 = vsel %vm407, %v363, 0
        %v410 = vsel %vm407, %v393, 0
        %412 = vmatprep.subr.mxu0 0.0
        %413 = vmatpush1.msra.mxu0 0.0
        %414 = vmatprep.subr.mxu0 0.0
        %415 = vmatpush1.msra.mxu0 0.0
        %416 = vmatprep.subr.mxu0 0.0
        %417 = vmatpush1.msra.mxu0 0.0
        %418 = vmatprep.subr.mxu0 0.0
        %419 = vmatpush1.msra.mxu0 0.0
        %420 = vmatprep.subr.mxu0 0.0
        %421 = vmatpush1.msra.mxu0 0.0
        %422 = vmatprep.subr.mxu0 0.0
        %423 = vmatpush1.msra.mxu0 0.0
        %424 = vmatprep.subr.mxu0 0.0
        %425 = vmatpush1.msra.mxu0 0.0
        %426 = vmatprep.subr.mxu0 0.0
        %427 = vmatpush1.msra.mxu0 0.0
        %428 = vmatprep.subr.mxu0 0.0
        %429 = vmatpush1.msra.mxu0 0.0
        %430 = vmatprep.subr.mxu0 0.0
        %431 = vmatpush1.msra.mxu0 0.0
        %432 = vmatprep.subr.mxu0 0.0
        %433 = vmatpush1.msra.mxu0 0.0
        %434 = vmatprep.subr.mxu0 0.0
        %435 = vmatpush1.msra.mxu0 0.0
        %436 = vmatprep.subr.mxu0 0.0
        %437 = vmatpush1.msra.mxu0 0.0
        %438 = vmatprep.subr.mxu0 0.0
        %439 = vmatpush1.msra.mxu0 0.0
        %440 = vmatprep.subr.mxu0 0.0
        %441 = vmatpush1.msra.mxu0 0.0
        %442 = vmatprep.subr.mxu0 %v410
        %443 = vmatpush1.msra.mxu0 %v408
        %444 = vmatprep.subr.mxu0 0.0
        %445 = vmatpush2.msra.mxu0 0.0
        %446 = vmatprep.subr.mxu0 0.0
        %447 = vmatpush2.msra.mxu0 0.0
        %448 = vmatprep.subr.mxu0 0.0
        %449 = vmatpush2.msra.mxu0 0.0
        %450 = vmatprep.subr.mxu0 0.0
        %451 = vmatpush2.msra.mxu0 0.0
        %452 = vmatprep.subr.mxu0 0.0
        %453 = vmatpush2.msra.mxu0 0.0
        %454 = vmatprep.subr.mxu0 0.0
        %455 = vmatpush2.msra.mxu0 0.0
        %456 = vmatprep.subr.mxu0 0.0
        %457 = vmatpush2.msra.mxu0 0.0
        %458 = vmatprep.subr.mxu0 0.0
        %459 = vmatpush2.msra.mxu0 0.0
        %460 = vmatprep.subr.mxu0 0.0
        %461 = vmatpush2.msra.mxu0 0.0
        %462 = vmatprep.subr.mxu0 0.0
        %463 = vmatpush2.msra.mxu0 0.0
        %464 = vmatprep.subr.mxu0 0.0
        %465 = vmatpush2.msra.mxu0 0.0
        %466 = vmatprep.subr.mxu0 0.0
        %467 = vmatpush2.msra.mxu0 0.0
        %468 = vmatprep.subr.mxu0 0.0
        %469 = vmatpush2.msra.mxu0 0.0
        %470 = vmatprep.subr.mxu0 0.0
        %471 = vmatpush2.msra.mxu0 0.0
        %472 = vmatprep.subr.mxu0 0.0
        %473 = vmatpush2.msra.mxu0 0.0
        %474 = vmatprep.subr.mxu0 0.0
        %475 = vmatpush2.msra.mxu0 0.0
        %476 = vmatprep.mubr.f32.mxu0 0.0
        %477 = vmatmul.mubr.f32.gmra.mxu0 %v396
        %v478 = vpop.f32.mrf.mxu0
        %v479 = vadd.f32 %v375, %v478
        %v480 = vpop.f32.mrf.mxu0
        %v481 = vadd.f32 %v375, %v480
        %482 = vmatprep.mubr.f32.mxu0 0.0
        %483 = vmatmul.mubr.f32.gmra.mxu0 %v399
        %v484 = vpop.f32.mrf.mxu0
        %v485 = vadd.f32 %v380, %v484
        %v486 = vpop.f32.mrf.mxu0
        %v487 = vadd.f32 %v380, %v486
        %488 = vmatprep.mubr.f32.mxu0 0.0
        %489 = vmatmul.mubr.f32.gmra.mxu0 %v402
        %v490 = vpop.f32.mrf.mxu0
        %v491 = vadd.f32 %v385, %v490
        %v492 = vpop.f32.mrf.mxu0
        %v493 = vadd.f32 %v385, %v492
        %494 = vmatprep.mubr.f32.mxu0 0.0
        %495 = vmatmul.mubr.f32.gmra.mxu0 %v405
        %v496 = vpop.f32.mrf.mxu0
        %v497 = vadd.f32 %v390, %v496
        %v498 = vpop.f32.mrf.mxu0
        %v499 = vadd.f32 %v390, %v498
        %500 = vdwg.mxu0
        %v501 = vmax.f32 %v479, 0.0
        %v502 = vmax.f32 %v481, 0.0
        %v503 = vmax.f32 %v485, 0.0
        %v504 = vmax.f32 %v487, 0.0
        %v505 = vmax.f32 %v491, 0.0
        %v506 = vmax.f32 %v493, 0.0
        %v507 = vmax.f32 %v497, 0.0
        %v508 = vmax.f32 %v499, 0.0
        %v509 = vld [vmem:[%s3] sm:$0xff]
        %v510 = vld [vmem:[%s3 + $0x8] sm:$0xff]
        %v511 = vld [vmem:[%s3 + $0x10] sm:$0xff]
        %v512 = vld [vmem:[%s3 + $0x18] sm:$0xff]
        %v513 = vld [vmem:[%s4] sm:$0xff]
        %v514 = vld [vmem:[%s4 + $0x8] sm:$0xff]
        %v515 = vld [vmem:[%s4 + $0x10] sm:$0xff]
        %v516 = vld [vmem:[%s4 + $0x18] sm:$0xff]
        %v517 = vld [vmem:[%s5] sm:$0xff]
        %v518 = vld [vmem:[%s5 + $0x8] sm:$0xff]
        %v519 = vld [vmem:[%s5 + $0x10] sm:$0xff]
        %v520 = vld [vmem:[%s5 + $0x18] sm:$0xff]
        %v522 = vsel %vm394, %v513, 0
        %v525 = vsel %vm394, %v514, 0
        %v528 = vsel %vm394, %v515, 0
        %v531 = vsel %vm394, %v516, 0
        %533 = vmatprep.subr.mxu0 0.0
        %534 = vmatpush1.msra.mxu0 0.0
        %535 = vmatprep.subr.mxu0 0.0
        %536 = vmatpush1.msra.mxu0 0.0
        %537 = vmatprep.subr.mxu0 0.0
        %538 = vmatpush1.msra.mxu0 0.0
        %539 = vmatprep.subr.mxu0 0.0
        %540 = vmatpush1.msra.mxu0 0.0
        %541 = vmatprep.subr.mxu0 0.0
        %542 = vmatpush1.msra.mxu0 0.0
        %543 = vmatprep.subr.mxu0 0.0
        %544 = vmatpush1.msra.mxu0 0.0
        %545 = vmatprep.subr.mxu0 0.0
        %546 = vmatpush1.msra.mxu0 0.0
        %547 = vmatprep.subr.mxu0 0.0
        %548 = vmatpush1.msra.mxu0 0.0
        %549 = vmatprep.subr.mxu0 0.0
        %550 = vmatpush1.msra.mxu0 0.0
        %551 = vmatprep.subr.mxu0 0.0
        %552 = vmatpush1.msra.mxu0 0.0
        %553 = vmatprep.subr.mxu0 0.0
        %554 = vmatpush1.msra.mxu0 0.0
        %555 = vmatprep.subr.mxu0 0.0
        %556 = vmatpush1.msra.mxu0 0.0
        %557 = vmatprep.subr.mxu0 0.0
        %558 = vmatpush1.msra.mxu0 0.0
        %559 = vmatprep.subr.mxu0 0.0
        %560 = vmatpush1.msra.mxu0 0.0
        %561 = vmatprep.subr.mxu0 0.0
        %562 = vmatpush1.msra.mxu0 0.0
        %563 = vmatprep.subr.mxu0 %v410
        %564 = vmatpush1.msra.mxu0 %v408
        %565 = vmatprep.subr.mxu0 0.0
        %566 = vmatpush2.msra.mxu0 0.0
        %567 = vmatprep.subr.mxu0 0.0
        %568 = vmatpush2.msra.mxu0 0.0
        %569 = vmatprep.subr.mxu0 0.0
        %570 = vmatpush2.msra.mxu0 0.0
        %571 = vmatprep.subr.mxu0 0.0
        %572 = vmatpush2.msra.mxu0 0.0
        %573 = vmatprep.subr.mxu0 0.0
        %574 = vmatpush2.msra.mxu0 0.0
        %575 = vmatprep.subr.mxu0 0.0
        %576 = vmatpush2.msra.mxu0 0.0
        %577 = vmatprep.subr.mxu0 0.0
        %578 = vmatpush2.msra.mxu0 0.0
        %579 = vmatprep.subr.mxu0 0.0
        %580 = vmatpush2.msra.mxu0 0.0
        %581 = vmatprep.subr.mxu0 0.0
        %582 = vmatpush2.msra.mxu0 0.0
        %583 = vmatprep.subr.mxu0 0.0
        %584 = vmatpush2.msra.mxu0 0.0
        %585 = vmatprep.subr.mxu0 0.0
        %586 = vmatpush2.msra.mxu0 0.0
        %587 = vmatprep.subr.mxu0 0.0
        %588 = vmatpush2.msra.mxu0 0.0
        %589 = vmatprep.subr.mxu0 0.0
        %590 = vmatpush2.msra.mxu0 0.0
        %591 = vmatprep.subr.mxu0 0.0
        %592 = vmatpush2.msra.mxu0 0.0
        %593 = vmatprep.subr.mxu0 0.0
        %594 = vmatpush2.msra.mxu0 0.0
        %595 = vmatprep.subr.mxu0 0.0
        %596 = vmatpush2.msra.mxu0 0.0
        %597 = vmatprep.mubr.f32.mxu0 0.0
        %598 = vmatmul.mubr.f32.gmra.mxu0 %v522
        %v599 = vpop.f32.mrf.mxu0
        %v600 = vadd.f32 0.0, %v599
        %v601 = vpop.f32.mrf.mxu0
        %v602 = vadd.f32 0.0, %v601
        %603 = vmatprep.mubr.f32.mxu0 0.0
        %604 = vmatmul.mubr.f32.gmra.mxu0 %v525
        %v605 = vpop.f32.mrf.mxu0
        %v606 = vadd.f32 0.0, %v605
        %v607 = vpop.f32.mrf.mxu0
        %v608 = vadd.f32 0.0, %v607
        %609 = vmatprep.mubr.f32.mxu0 0.0
        %610 = vmatmul.mubr.f32.gmra.mxu0 %v528
        %v611 = vpop.f32.mrf.mxu0
        %v612 = vadd.f32 0.0, %v611
        %v613 = vpop.f32.mrf.mxu0
        %v614 = vadd.f32 0.0, %v613
        %615 = vmatprep.mubr.f32.mxu0 0.0
        %616 = vmatmul.mubr.f32.gmra.mxu0 %v531
        %v617 = vpop.f32.mrf.mxu0
        %v618 = vadd.f32 0.0, %v617
        %v619 = vpop.f32.mrf.mxu0
        %v620 = vadd.f32 0.0, %v619
        %621 = vdwg.mxu0
        %vm622 = vcmask 236544
        %v624 = vsel %vm622, %v509, 0
        %v627 = vsel %vm622, %v510, 0
        %v630 = vsel %vm622, %v511, 0
        %v633 = vsel %vm622, %v512, 0
        %vm635 = vcmask 1044480
        %v637 = vsel %vm635, %v507, 0
        %v640 = vsel %vm635, %v508, 0
        %642 = vmatprep.subr.mxu0 0.0
        %643 = vmatpush1.msra.mxu0 0.0
        %644 = vmatprep.subr.mxu0 0.0
        %645 = vmatpush1.msra.mxu0 0.0
        %646 = vmatprep.subr.mxu0 0.0
        %647 = vmatpush1.msra.mxu0 0.0
        %648 = vmatprep.subr.mxu0 0.0
        %649 = vmatpush1.msra.mxu0 0.0
        %650 = vmatprep.subr.mxu0 0.0
        %651 = vmatpush1.msra.mxu0 0.0
        %652 = vmatprep.subr.mxu0 0.0
        %653 = vmatpush1.msra.mxu0 0.0
        %654 = vmatprep.subr.mxu0 0.0
        %655 = vmatpush1.msra.mxu0 0.0
        %656 = vmatprep.subr.mxu0 0.0
        %657 = vmatpush1.msra.mxu0 0.0
        %658 = vmatprep.subr.mxu0 0.0
        %659 = vmatpush1.msra.mxu0 0.0
        %660 = vmatprep.subr.mxu0 0.0
        %661 = vmatpush1.msra.mxu0 0.0
        %662 = vmatprep.subr.mxu0 0.0
        %663 = vmatpush1.msra.mxu0 0.0
        %664 = vmatprep.subr.mxu0 0.0
        %665 = vmatpush1.msra.mxu0 0.0
        %666 = vmatprep.subr.mxu0 %v640
        %667 = vmatpush1.msra.mxu0 %v637
        %668 = vmatprep.subr.mxu0 %v506
        %669 = vmatpush1.msra.mxu0 %v505
        %670 = vmatprep.subr.mxu0 %v504
        %671 = vmatpush1.msra.mxu0 %v503
        %672 = vmatprep.subr.mxu0 %v502
        %673 = vmatpush1.msra.mxu0 %v501
        %674 = vmatprep.subr.mxu0 0.0
        %675 = vmatpush2.msra.mxu0 0.0
        %676 = vmatprep.subr.mxu0 0.0
        %677 = vmatpush2.msra.mxu0 0.0
        %678 = vmatprep.subr.mxu0 0.0
        %679 = vmatpush2.msra.mxu0 0.0
        %680 = vmatprep.subr.mxu0 0.0
        %681 = vmatpush2.msra.mxu0 0.0
        %682 = vmatprep.subr.mxu0 0.0
        %683 = vmatpush2.msra.mxu0 0.0
        %684 = vmatprep.subr.mxu0 0.0
        %685 = vmatpush2.msra.mxu0 0.0
        %686 = vmatprep.subr.mxu0 0.0
        %687 = vmatpush2.msra.mxu0 0.0
        %688 = vmatprep.subr.mxu0 0.0
        %689 = vmatpush2.msra.mxu0 0.0
        %690 = vmatprep.subr.mxu0 0.0
        %691 = vmatpush2.msra.mxu0 0.0
        %692 = vmatprep.subr.mxu0 0.0
        %693 = vmatpush2.msra.mxu0 0.0
        %694 = vmatprep.subr.mxu0 0.0
        %695 = vmatpush2.msra.mxu0 0.0
        %696 = vmatprep.subr.mxu0 0.0
        %697 = vmatpush2.msra.mxu0 0.0
        %698 = vmatprep.subr.mxu0 0.0
        %699 = vmatpush2.msra.mxu0 0.0
        %700 = vmatprep.subr.mxu0 0.0
        %701 = vmatpush2.msra.mxu0 0.0
        %702 = vmatprep.subr.mxu0 0.0
        %703 = vmatpush2.msra.mxu0 0.0
        %704 = vmatprep.subr.mxu0 0.0
        %705 = vmatpush2.msra.mxu0 0.0
        %706 = vmatprep.mubr.f32.mxu0 0.0
        %707 = vmatmul.mubr.f32.gmra.mxu0 %v624
        %v708 = vpop.f32.mrf.mxu0
        %v709 = vadd.f32 %v600, %v708
        %v710 = vpop.f32.mrf.mxu0
        %v711 = vadd.f32 %v602, %v710
        %712 = vmatprep.mubr.f32.mxu0 0.0
        %713 = vmatmul.mubr.f32.gmra.mxu0 %v627
        %v714 = vpop.f32.mrf.mxu0
        %v715 = vadd.f32 %v606, %v714
        %v716 = vpop.f32.mrf.mxu0
        %v717 = vadd.f32 %v608, %v716
        %718 = vmatprep.mubr.f32.mxu0 0.0
        %719 = vmatmul.mubr.f32.gmra.mxu0 %v630
        %v720 = vpop.f32.mrf.mxu0
        %v721 = vadd.f32 %v612, %v720
        %v722 = vpop.f32.mrf.mxu0
        %v723 = vadd.f32 %v614, %v722
        %724 = vmatprep.mubr.f32.mxu0 0.0
        %725 = vmatmul.mubr.f32.gmra.mxu0 %v633
        %v726 = vpop.f32.mrf.mxu0
        %v727 = vadd.f32 %v618, %v726
        %v728 = vpop.f32.mrf.mxu0
        %v729 = vadd.f32 %v620, %v728
        %730 = vdwg.mxu0
        %732 = vset.pattern.permute.xlu0 0
        %733 = vperm.xlu0 %732, %v517
        %v734 = vpop.permute.xlu0 %733
        %737 = vset.pattern.permute.xlu0 0
        %738 = vperm.xlu0 %737, %v518
        %v739 = vpop.permute.xlu0 %738
        %742 = vset.pattern.permute.xlu0 0
        %743 = vperm.xlu0 %742, %v519
        %v744 = vpop.permute.xlu0 %743
        %747 = vset.pattern.permute.xlu0 0
        %748 = vperm.xlu0 %747, %v520
        %v749 = vpop.permute.xlu0 %748
        %v751 = vadd.f32 %v709, %v734
        %v752 = vadd.f32 %v711, %v734
        %v753 = vadd.f32 %v715, %v739
        %v754 = vadd.f32 %v717, %v739
        %v755 = vadd.f32 %v721, %v744
        %v756 = vadd.f32 %v723, %v744
        %v757 = vadd.f32 %v727, %v749
        %v758 = vadd.f32 %v729, %v749
        %v759 = vmax.f32 %v751, 0.0
        %v760 = vmax.f32 %v752, 0.0
        %v761 = vmax.f32 %v753, 0.0
        %v762 = vmax.f32 %v754, 0.0
        %v763 = vmax.f32 %v755, 0.0
        %v764 = vmax.f32 %v756, 0.0
        %v765 = vmax.f32 %v757, 0.0
        %v766 = vmax.f32 %v758, 0.0
        %v767 = vld [vmem:[%s6] sm:$0xff]
        %v768 = vld [vmem:[%s6 + $0x8] sm:$0xff]
        %v769 = vld [vmem:[%s6 + $0x10] sm:$0xff]
        %v770 = vld [vmem:[%s6 + $0x18] sm:$0xff]
        %v771 = vld [vmem:[%s7] sm:$0xff]
        %v772 = vld [vmem:[%s7 + $0x8] sm:$0xff]
        %v773 = vld [vmem:[%s7 + $0x10] sm:$0xff]
        %v774 = vld [vmem:[%s7 + $0x18] sm:$0xff]
        %776 = vset.pattern.permute.xlu0 0
        %777 = vperm.xlu0 %776, %v771
        %v778 = vpop.permute.xlu0 %777
        %781 = vset.pattern.permute.xlu0 0
        %782 = vperm.xlu0 %781, %v772
        %v783 = vpop.permute.xlu0 %782
        %786 = vset.pattern.permute.xlu0 0
        %787 = vperm.xlu0 %786, %v773
        %v788 = vpop.permute.xlu0 %787
        %791 = vset.pattern.permute.xlu0 0
        %792 = vperm.xlu0 %791, %v774
        %v793 = vpop.permute.xlu0 %792
        %vm795 = vcmask 261120
        %v797 = vsel %vm795, %v767, 0
        %v800 = vsel %vm795, %v768, 0
        %v803 = vsel %vm795, %v769, 0
        %v806 = vsel %vm795, %v770, 0
        %808 = vmatprep.subr.mxu0 0.0
        %809 = vmatpush1.msra.mxu0 0.0
        %810 = vmatprep.subr.mxu0 0.0
        %811 = vmatpush1.msra.mxu0 0.0
        %812 = vmatprep.subr.mxu0 0.0
        %813 = vmatpush1.msra.mxu0 0.0
        %814 = vmatprep.subr.mxu0 0.0
        %815 = vmatpush1.msra.mxu0 0.0
        %816 = vmatprep.subr.mxu0 0.0
        %817 = vmatpush1.msra.mxu0 0.0
        %818 = vmatprep.subr.mxu0 0.0
        %819 = vmatpush1.msra.mxu0 0.0
        %820 = vmatprep.subr.mxu0 0.0
        %821 = vmatpush1.msra.mxu0 0.0
        %822 = vmatprep.subr.mxu0 0.0
        %823 = vmatpush1.msra.mxu0 0.0
        %824 = vmatprep.subr.mxu0 0.0
        %825 = vmatpush1.msra.mxu0 0.0
        %826 = vmatprep.subr.mxu0 0.0
        %827 = vmatpush1.msra.mxu0 0.0
        %828 = vmatprep.subr.mxu0 0.0
        %829 = vmatpush1.msra.mxu0 0.0
        %830 = vmatprep.subr.mxu0 0.0
        %831 = vmatpush1.msra.mxu0 0.0
        %832 = vmatprep.subr.mxu0 %v766
        %833 = vmatpush1.msra.mxu0 %v765
        %834 = vmatprep.subr.mxu0 %v764
        %835 = vmatpush1.msra.mxu0 %v763
        %836 = vmatprep.subr.mxu0 %v762
        %837 = vmatpush1.msra.mxu0 %v761
        %838 = vmatprep.subr.mxu0 %v760
        %839 = vmatpush1.msra.mxu0 %v759
        %840 = vmatprep.subr.mxu0 0.0
        %841 = vmatpush2.msra.mxu0 0.0
        %842 = vmatprep.subr.mxu0 0.0
        %843 = vmatpush2.msra.mxu0 0.0
        %844 = vmatprep.subr.mxu0 0.0
        %845 = vmatpush2.msra.mxu0 0.0
        %846 = vmatprep.subr.mxu0 0.0
        %847 = vmatpush2.msra.mxu0 0.0
        %848 = vmatprep.subr.mxu0 0.0
        %849 = vmatpush2.msra.mxu0 0.0
        %850 = vmatprep.subr.mxu0 0.0
        %851 = vmatpush2.msra.mxu0 0.0
        %852 = vmatprep.subr.mxu0 0.0
        %853 = vmatpush2.msra.mxu0 0.0
        %854 = vmatprep.subr.mxu0 0.0
        %855 = vmatpush2.msra.mxu0 0.0
        %856 = vmatprep.subr.mxu0 0.0
        %857 = vmatpush2.msra.mxu0 0.0
        %858 = vmatprep.subr.mxu0 0.0
        %859 = vmatpush2.msra.mxu0 0.0
        %860 = vmatprep.subr.mxu0 0.0
        %861 = vmatpush2.msra.mxu0 0.0
        %862 = vmatprep.subr.mxu0 0.0
        %863 = vmatpush2.msra.mxu0 0.0
        %864 = vmatprep.subr.mxu0 0.0
        %865 = vmatpush2.msra.mxu0 0.0
        %866 = vmatprep.subr.mxu0 0.0
        %867 = vmatpush2.msra.mxu0 0.0
        %868 = vmatprep.subr.mxu0 0.0
        %869 = vmatpush2.msra.mxu0 0.0
        %870 = vmatprep.subr.mxu0 0.0
        %871 = vmatpush2.msra.mxu0 0.0
        %872 = vmatprep.mubr.f32.mxu0 0.0
        %873 = vmatmul.mubr.f32.gmra.mxu0 %v797
        %v874 = vpop.f32.mrf.mxu0
        %v875 = vadd.f32 %v778, %v874
        %v876 = vpop.f32.mrf.mxu0
        %v877 = vadd.f32 %v778, %v876
        %878 = vmatprep.mubr.f32.mxu0 0.0
        %879 = vmatmul.mubr.f32.gmra.mxu0 %v800
        %v880 = vpop.f32.mrf.mxu0
        %v881 = vadd.f32 %v783, %v880
        %v882 = vpop.f32.mrf.mxu0
        %v883 = vadd.f32 %v783, %v882
        %884 = vmatprep.mubr.f32.mxu0 0.0
        %885 = vmatmul.mubr.f32.gmra.mxu0 %v803
        %v886 = vpop.f32.mrf.mxu0
        %v887 = vadd.f32 %v788, %v886
        %v888 = vpop.f32.mrf.mxu0
        %v889 = vadd.f32 %v788, %v888
        %890 = vmatprep.mubr.f32.mxu0 0.0
        %891 = vmatmul.mubr.f32.gmra.mxu0 %v806
        %v892 = vpop.f32.mrf.mxu0
        %v893 = vadd.f32 %v793, %v892
        %v894 = vpop.f32.mrf.mxu0
        %v895 = vadd.f32 %v793, %v894
        %896 = vdwg.mxu0
        %v897 = vmax.f32 %v875, 0.0
        %v898 = vmax.f32 %v877, 0.0
        %v899 = vmax.f32 %v881, 0.0
        %v900 = vmax.f32 %v883, 0.0
        %v901 = vmax.f32 %v887, 0.0
        %v902 = vmax.f32 %v889, 0.0
        %v903 = vmax.f32 %v893, 0.0
        %v904 = vmax.f32 %v895, 0.0
        %v905 = vld [vmem:[%s8] sm:$0x1]
        %v906 = vld [vmem:[#allocation2] sm:$0x1]
        %908 = vset.pattern.permute.xlu0 0
        %909 = vperm.xlu0 %908, %v906
        %v910 = vpop.permute.xlu0 %909
        %v912 = vlaneseq
        %v913 = vshrl.u32 %v912, 7
        %v914 = vsub.s32 0, %v913
        %v915 = vrot.slane %v910, %v914
        %v917 = vsel %vm795, %v905, 0
        %919 = vmatprep.subr.mxu0 0.0
        %920 = vmatpush1.msra.mxu0 0.0
        %921 = vmatprep.subr.mxu0 0.0
        %922 = vmatpush1.msra.mxu0 0.0
        %923 = vmatprep.subr.mxu0 0.0
        %924 = vmatpush1.msra.mxu0 0.0
        %925 = vmatprep.subr.mxu0 0.0
        %926 = vmatpush1.msra.mxu0 0.0
        %927 = vmatprep.subr.mxu0 0.0
        %928 = vmatpush1.msra.mxu0 0.0
        %929 = vmatprep.subr.mxu0 0.0
        %930 = vmatpush1.msra.mxu0 0.0
        %931 = vmatprep.subr.mxu0 0.0
        %932 = vmatpush1.msra.mxu0 0.0
        %933 = vmatprep.subr.mxu0 0.0
        %934 = vmatpush1.msra.mxu0 0.0
        %935 = vmatprep.subr.mxu0 0.0
        %936 = vmatpush1.msra.mxu0 0.0
        %937 = vmatprep.subr.mxu0 0.0
        %938 = vmatpush1.msra.mxu0 0.0
        %939 = vmatprep.subr.mxu0 0.0
        %940 = vmatpush1.msra.mxu0 0.0
        %941 = vmatprep.subr.mxu0 0.0
        %942 = vmatpush1.msra.mxu0 0.0
        %943 = vmatprep.subr.mxu0 %v904
        %944 = vmatpush1.msra.mxu0 %v903
        %945 = vmatprep.subr.mxu0 %v902
        %946 = vmatpush1.msra.mxu0 %v901
        %947 = vmatprep.subr.mxu0 %v900
        %948 = vmatpush1.msra.mxu0 %v899
        %949 = vmatprep.subr.mxu0 %v898
        %950 = vmatpush1.msra.mxu0 %v897
        %951 = vmatprep.subr.mxu0 0.0
        %952 = vmatpush2.msra.mxu0 0.0
        %953 = vmatprep.subr.mxu0 0.0
        %954 = vmatpush2.msra.mxu0 0.0
        %955 = vmatprep.subr.mxu0 0.0
        %956 = vmatpush2.msra.mxu0 0.0
        %957 = vmatprep.subr.mxu0 0.0
        %958 = vmatpush2.msra.mxu0 0.0
        %959 = vmatprep.subr.mxu0 0.0
        %960 = vmatpush2.msra.mxu0 0.0
        %961 = vmatprep.subr.mxu0 0.0
        %962 = vmatpush2.msra.mxu0 0.0
        %963 = vmatprep.subr.mxu0 0.0
        %964 = vmatpush2.msra.mxu0 0.0
        %965 = vmatprep.subr.mxu0 0.0
        %966 = vmatpush2.msra.mxu0 0.0
        %967 = vmatprep.subr.mxu0 0.0
        %968 = vmatpush2.msra.mxu0 0.0
        %969 = vmatprep.subr.mxu0 0.0
        %970 = vmatpush2.msra.mxu0 0.0
        %971 = vmatprep.subr.mxu0 0.0
        %972 = vmatpush2.msra.mxu0 0.0
        %973 = vmatprep.subr.mxu0 0.0
        %974 = vmatpush2.msra.mxu0 0.0
        %975 = vmatprep.subr.mxu0 0.0
        %976 = vmatpush2.msra.mxu0 0.0
        %977 = vmatprep.subr.mxu0 0.0
        %978 = vmatpush2.msra.mxu0 0.0
        %979 = vmatprep.subr.mxu0 0.0
        %980 = vmatpush2.msra.mxu0 0.0
        %981 = vmatprep.subr.mxu0 0.0
        %982 = vmatpush2.msra.mxu0 0.0
        %983 = vmatprep.mubr.f32.mxu0 0.0
        %984 = vmatmul.mubr.f32.gmra.mxu0 %v917
        %v985 = vpop.f32.mrf.mxu0
        %v986 = vadd.f32 %v915, %v985
        %v987 = vpop.f32.mrf.mxu0
        %v988 = vadd.f32 %v915, %v987
        %989 = vdwg.mxu0
        %v992 = vcombine.low %v986, %v988
        %v994 = vunpack.c.l.s4 1966171168
        %v995 = vunpack.c.0.s8 %v994
        %v996 = vlaneseq
        %v997 = vshrl.u32 %v996, 7
        %v998 = vsub.s32 %v995, %v997
        %v999 = vrot.slane %v992, %v998
        %v1001 = vunpack.c.l.s4 1966171168
        %v1002 = vunpack.c.0.s8 %v1001
        %v1003 = vlaneseq
        %v1004 = vshrl.u32 %v1003, 7
        %v1005 = vsub.s32 %v1002, %v1004
        %v1006 = vrot.slane %v999, %v1005
        %v1008 = vlaneseq
        %vm1009 = vcmp.ge.s32.totalorder %v1008, 0
        %vm1010 = vcmp.lt.s32.totalorder %v1008, 256
        %vm1011 = vmand %vm1009, %vm1010
        %1012 = vst.msk [vmem:[%s355] sm:$0x3] %vm1011, %v1006
        %s1013 = sand.u32 %s249, 1
        %s1014 = scalar_lea.sflag [#allocation4], %s1013
        %s1015 = sand.u32 %s249, 1
        %s1016 = smul.addr %s1015, 2
        %s1017 = scalar_lea.vmem [#allocation3], %s1016
        // Predicated region
        $region61: #{tpu_custom_call.1} parent=59 // pred_check
          %p1018 = pneg %p259
        $region62: #{tpu_custom_call.1} parent=59 // pred_check_branch
          %1020 = sbr.rel (%p1018) target = $region64
        $region63: #{tpu_custom_call.1} parent=59 // pred_region
          %s1021 = smul.u32 2, %s26
          %s1023 = ssub.s32 32, 32
          %1024 = vsyncadd %s1014, %s1023
          %s1025 = smul.addr %s1021, 16
          %s1026 = scalar_lea.hbm %s10, %s1025
          %s1028 = sshll.u32 %s1017, 4
          %s1029 = int_to_ptr.vmem [resolvable:$true] %s1028
          %1031 = dma.vmem_to_hbm [thread:$0]  %s1029, 32, %s1026, %s1014
        $region64: #{tpu_custom_call.1} parent=59 // pred_fallthru
          _
      $region60: #{tpu_custom_call.1} parent=5 // pred_fallthru
        _
      %p1032 = scmp.le.s32.totalorder 2, %s21
      // Predicated region
      $region65: #{tpu_custom_call.1} parent=5 // pred_check
        %p1033 = pneg %p1032
      $region66: #{tpu_custom_call.1} parent=5 // pred_check_branch
        %1035 = sbr.rel (%p1033) target = $region68
      $region67: #{tpu_custom_call.1} parent=5 // pred_region
        %s1036 = ssub.s32 %s21, 2
        // Predicated region
        $region69: #{tpu_custom_call.1} parent=67 // pred_check
          %p1037 = pneg %p265
        $region70: #{tpu_custom_call.1} parent=67 // pred_check_branch
          %1039 = sbr.rel (%p1037) target = $region72
        $region71: #{tpu_custom_call.1} parent=67 // pred_region
          %s1040 = sand.u32 %s250, 1
          %s1041 = scalar_lea.sflag [#allocation4], %s1040
          %s1042 = sand.u32 %s250, 1
          %s1043 = smul.addr %s1042, 2
          %s1044 = scalar_lea.vmem [#allocation3], %s1043
          %1045 = dma.done %s1041, 32
        $region72: #{tpu_custom_call.1} parent=67 // pred_fallthru
          _
      $region68: #{tpu_custom_call.1} parent=5 // pred_fallthru
        _
    $region6: #{tpu_custom_call.1} parent=1 // loop_footer
      %s25 = sadd.s32 1, %s21
    $region7: #{tpu_custom_call.1} parent=1 // loop_footer_branch
      %20 = sbr.rel target = $region3
    $region8: #{tpu_custom_call.1} parent=1 // loop_exit
      _
    %1046 = vsyncpa [#allocation4], 1
    %s1047 = scalar_lea.sflag [#allocation4], 1
    %1048 = vsyncpa %s1047, 1

</llo_original>
